<compile_context>
chip_gen: v5e
topology: v5e:2x2
jax: 0.10.0
libtpu: 0.0.40
codegen_flags: <defaults>
</compile_context>

<pallas_src>
import functools

import jax
import jax.numpy as jnp
from jax.experimental import pallas as pl
from jax.experimental.pallas import tpu as pltpu


# ---------------------------------------------------------------------------
# VMEM budgeting helpers (generation-aware).
# ---------------------------------------------------------------------------
def _vmem_capacity_bytes():
    try:
        info = pltpu.get_tpu_info()
        cap = getattr(info, "vmem_capacity_bytes", None)
        if cap:
            return int(cap)
    except Exception:
        pass
    return 64 * 1024 * 1024  # conservative (v7x physical VMEM)


def _vmem_budget_bytes():
    # ~48 MiB on v7x (64 MiB physical), ~96 MiB on v5e/v6e (128 MiB physical).
    return int(min(_vmem_capacity_bytes() * 3 // 4, 100 * 1024 * 1024))


def _estimate_main_vmem_bytes(block_q, Lk, D, n_head, d_k, d_v,
                              cd_bytes, attn_bytes):
    f32 = 4
    dbl = 2  # Pallas double-buffers pipelined blocks by default
    blocks = (dbl * block_q * D * f32                        # q tile (f32)
              + dbl * n_head * Lk * (d_k + d_v) * cd_bytes   # K/V projections
              + dbl * D * n_head * d_k * cd_bytes            # w_qs (flat)
              + dbl * n_head * d_v * D * cd_bytes            # fc   (flat)
              + dbl * 2 * D * f32                            # gamma, beta
              + dbl * block_q * D * f32                      # out tile
              + dbl * block_q * Lk * attn_bytes)             # attn tile
    scratch = n_head * block_q * (d_k + d_v) * cd_bytes      # q-proj + ctx cache
    transient = 4 * block_q * Lk * f32 + 3 * block_q * D * f32
    return blocks + scratch + transient


# ---------------------------------------------------------------------------
# K / V projection kernel: one full-width matmul per (batch, Lk-tile),
# unpacked head-major for the attention kernel.
# ---------------------------------------------------------------------------
def _kv_proj_kernel(k_ref, v_ref, wk_ref, wv_ref, kp_ref, vp_ref,
                    *, n_head, d_k, d_v):
    f32 = jnp.float32
    kw = jnp.dot(k_ref[...], wk_ref[...], preferred_element_type=f32)  # (Tk, H*d_k)
    vw = jnp.dot(v_ref[...], wv_ref[...], preferred_element_type=f32)  # (Tk, H*d_v)
    for hh in range(n_head):  # static unpack -> head-major output
        kp_ref[hh] = kw[:, hh * d_k:(hh + 1) * d_k].astype(kp_ref.dtype)
        vp_ref[hh] = vw[:, hh * d_v:(hh + 1) * d_v].astype(vp_ref.dtype)


def _project_kv(k, v, wk, wv, *, n_head, d_k, d_v, compute_dtype, vmem_limit):
    B, Lk, D = k.shape
    if Lk <= 512:
        block_lk = Lk
    else:
        block_lk = Lk
        for cand in (512, 256, 128):
            if Lk % cand == 0:
                block_lk = cand
                break

    kernel = functools.partial(_kv_proj_kernel, n_head=n_head, d_k=d_k, d_v=d_v)
    out_shape = (jax.ShapeDtypeStruct((B, n_head, Lk, d_k), compute_dtype),
                 jax.ShapeDtypeStruct((B, n_head, Lk, d_v), compute_dtype))

    return pl.pallas_call(
        kernel,
        out_shape=out_shape,
        grid_spec=pltpu.PrefetchScalarGridSpec(
            num_scalar_prefetch=0,
            grid=(B, Lk // block_lk),
            in_specs=[
                pl.BlockSpec((None, block_lk, D), lambda b, l: (b, l, 0)),      # k
                pl.BlockSpec((None, block_lk, D), lambda b, l: (b, l, 0)),      # v
                pl.BlockSpec((D, n_head * d_k), lambda b, l: (0, 0)),           # w_ks
                pl.BlockSpec((D, n_head * d_v), lambda b, l: (0, 0)),           # w_vs
            ],
            out_specs=(
                pl.BlockSpec((None, n_head, block_lk, d_k),
                             lambda b, l: (b, 0, l, 0)),
                pl.BlockSpec((None, n_head, block_lk, d_v),
                             lambda b, l: (b, 0, l, 0)),
            )),
        compiler_params=pltpu.CompilerParams(
            dimension_semantics=("parallel", "parallel"),
            vmem_limit_bytes=int(vmem_limit)),
    )(k.astype(compute_dtype), v.astype(compute_dtype),
      wk.astype(compute_dtype), wv.astype(compute_dtype))


# ---------------------------------------------------------------------------
# Main attention kernel.  grid = (B, Lq // block_q, n_head); heads are the
# innermost ("arbitrary") axis, batch and q-tile axes are "parallel".
# ---------------------------------------------------------------------------
def _mha_kernel(q_ref, kp_ref, vp_ref, wq_ref, wfc_ref, gamma_ref, beta_ref,
                out_ref, attn_ref, qcache_ref, ctx_ref,
                *, n_head, d_k, d_v, eps, compute_dtype):
    del d_v  # shape information is carried by the refs
    h = pl.program_id(2)
    f32 = jnp.float32
    cd = compute_dtype
    scale = 1.0 / (d_k ** 0.5)

    x_q = q_ref[...]                                    # (TQ, D) f32 (residual)

    # Hoisted full-width Q projection: one (TQ, D) x (D, H*d_k) MXU call per
    # q-tile at the first head, scale folded in, unpacked head-major.
    @pl.when(h == 0)
    def _():
        wide = jnp.dot(x_q.astype(cd), wq_ref[...],
                       preferred_element_type=f32) * scale          # (TQ, H*d_k)
        for hh in range(n_head):
            qcache_ref[hh] = wide[:, hh * d_k:(hh + 1) * d_k].astype(cd)

    qh = qcache_ref[h]                                  # (TQ, d_k)  compute dtype
    kh = kp_ref[h]                                      # (Lk, d_k)  compute dtype
    vh = vp_ref[h]                                      # (Lk, d_v)  compute dtype

    # Scores: contract the last dims directly (A.B^T on the MXU, no transpose).
    s = jax.lax.dot_general(qh, kh, (((1,), (1,)), ((), ())),
                            preferred_element_type=f32)             # (TQ, Lk)
    # TODO(synk): mask path (masked_fill(mask == 0, -1e9)) omitted -- mask=None.

    # Numerically-stable softmax in f32; approx reciprocal runs on the EUP.
    m = jnp.max(s, axis=-1, keepdims=True)
    e = jnp.exp(s - m)
    denom = jnp.sum(e, axis=-1, keepdims=True)
    a = e * pl.reciprocal(denom, approx=True)                       # (TQ, Lk)
    # TODO(synk): attention dropout is identity in eval mode; omitted.
    attn_ref[...] = a.astype(attn_ref.dtype)

    # Per-head context, cached head-major for a single fused fc matmul.
    ctx_ref[h] = jnp.dot(a.astype(cd), vh,
                         preferred_element_type=f32).astype(cd)     # (TQ, d_v)

    @pl.when(h == n_head - 1)
    def _():
        ctx_flat = jnp.concatenate([ctx_ref[hh] for hh in range(n_head)],
                                   axis=-1)                         # (TQ, H*d_v)
        # TODO(synk): post-fc dropout is identity in eval mode; omitted.
        o = jnp.dot(ctx_flat, wfc_ref[...],
                    preferred_element_type=f32) + x_q               # (TQ, D) f32
        # One-pass LayerNorm statistics (sum and sum-of-squares).
        inv_d = 1.0 / o.shape[-1]
        s1 = jnp.sum(o, axis=-1, keepdims=True)
        s2 = jnp.sum(o * o, axis=-1, keepdims=True)
        mu = s1 * inv_d
        var = jnp.maximum(s2 * inv_d - mu * mu, 0.0)
        y = (o - mu) * jax.lax.rsqrt(var + eps)
        out_ref[...] = y * gamma_ref[...] + beta_ref[...]


def multi_head_attention(q, k, v, wq, wk, wv, wfc, gamma, beta, *,
                         n_head, d_k, d_v, block_q=None,
                         compute_dtype=jnp.bfloat16,
                         attn_dtype=jnp.bfloat16,
                         eps=1e-6):
    B, Lq, D = q.shape
    Lk = k.shape[1]
    cd_bytes = jnp.dtype(compute_dtype).itemsize
    attn_bytes = jnp.dtype(attn_dtype).itemsize

    budget = _vmem_budget_bytes()

    # Generation-aware default q-tile size (bigger tiles on 128-MiB-VMEM chips).
    if block_q is None:
        bq = 512 if budget >= (80 << 20) else 256
        while bq > 16 and Lq % bq != 0:
            bq //= 2
        block_q = bq if Lq % bq == 0 else Lq
    block_q = min(block_q, Lq)

    # Shrink block_q if the working set exceeds the VMEM budget; fail loudly
    # if it still does not fit (instead of silently clamping the limit).
    def _est(bq):
        return _estimate_main_vmem_bytes(bq, Lk, D, n_head, d_k, d_v,
                                         cd_bytes, attn_bytes)
    while _est(block_q) > budget and block_q > 16 and Lq % (block_q // 2) == 0:
        block_q //= 2
    if _est(block_q) > budget:
        raise ValueError(
            f"MHA kernel working set ({_est(block_q)} B at block_q={block_q}) "
            f"exceeds the VMEM budget ({budget} B); reduce Lk/D or block_q.")

    assert Lq % block_q == 0, "Lq must be divisible by block_q"
    assert block_q == Lq or block_q % 16 == 0, \
        "block_q must be a multiple of 16 (bf16 sublane tiling) or equal Lq"
    num_q_tiles = Lq // block_q

    # K/V projections: separate lane-dense pallas_call, head-major bf16 output.
    kp, vp = _project_kv(k, v, wk, wv, n_head=n_head, d_k=d_k, d_v=d_v,
                         compute_dtype=compute_dtype, vmem_limit=budget)

    # Flat weights in the compute dtype (wq/wfc are already (in, out) flat).
    wq_flat = wq.astype(compute_dtype)                    # (D, H*d_k)
    wfc_flat = wfc.astype(compute_dtype)                  # (H*d_v, D)
    gamma2 = jnp.asarray(gamma, jnp.float32).reshape(1, D)
    beta2 = jnp.asarray(beta, jnp.float32).reshape(1, D)

    kernel = functools.partial(
        _mha_kernel, n_head=n_head, d_k=d_k, d_v=d_v, eps=eps,
        compute_dtype=compute_dtype)

    out_shapes = (
        jax.ShapeDtypeStruct((B, Lq, D), jnp.float32),
        jax.ShapeDtypeStruct((B, n_head, Lq, Lk), attn_dtype),
    )

    vmem_limit = int(min(max(int(_est(block_q) * 1.5), 16 * 1024 * 1024), budget))
    grid = (B, num_q_tiles, n_head)

    return pl.pallas_call(
        kernel,
        out_shape=out_shapes,
        grid_spec=pltpu.PrefetchScalarGridSpec(
            num_scalar_prefetch=0,
            grid=grid,
            in_specs=[
                pl.BlockSpec((None, block_q, D),
                             lambda b, qi, h: (b, qi, 0)),             # q (f32)
                pl.BlockSpec((None, n_head, Lk, d_k),
                             lambda b, qi, h: (b, 0, 0, 0)),           # K proj
                pl.BlockSpec((None, n_head, Lk, d_v),
                             lambda b, qi, h: (b, 0, 0, 0)),           # V proj
                pl.BlockSpec((D, n_head * d_k),
                             lambda b, qi, h: (0, 0)),                 # w_qs
                pl.BlockSpec((n_head * d_v, D),
                             lambda b, qi, h: (0, 0)),                 # fc
                pl.BlockSpec((1, D), lambda b, qi, h: (0, 0)),         # gamma
                pl.BlockSpec((1, D), lambda b, qi, h: (0, 0)),         # beta
            ],
            out_specs=(
                pl.BlockSpec((None, block_q, D),
                             lambda b, qi, h: (b, qi, 0)),             # out
                pl.BlockSpec((None, None, block_q, Lk),
                             lambda b, qi, h: (b, h, qi, 0)),          # attn
            ),
            scratch_shapes=[
                pltpu.VMEM((n_head, block_q, d_k), compute_dtype),     # Q-proj cache
                pltpu.VMEM((n_head, block_q, d_v), compute_dtype),     # ctx cache
            ]),
        compiler_params=pltpu.CompilerParams(
            # b and qi carry no cross-iteration state (the K/V projection is a
            # separate call); only the head axis reduces into scratch.
            dimension_semantics=("parallel", "parallel", "arbitrary"),
            vmem_limit_bytes=vmem_limit),
    )(q, kp, vp, wq_flat, wfc_flat, gamma2, beta2)


def reference(q, k, v, wq, wk, wv, wfc, gamma, beta, *, n_head, d_k, d_v,
              compute_dtype=jnp.bfloat16, eps=1e-6):
    """Pure-JAX reference mirroring the kernel's mixed-precision structure."""
    f32 = jnp.float32
    cd = compute_dtype
    B, Lq, D = q.shape
    scale = 1.0 / (d_k ** 0.5)
    wq_r = wq.reshape(D, n_head, d_k).astype(cd)
    wk_r = wk.reshape(D, n_head, d_k).astype(cd)
    wv_r = wv.reshape(D, n_head, d_v).astype(cd)
    wfc_r = wfc.reshape(n_head, d_v, D).astype(cd)
    qp = jnp.einsum('bld,dhk->blhk', q.astype(cd), wq_r,
                    preferred_element_type=f32) * scale
    kp = jnp.einsum('bld,dhk->blhk', k.astype(cd), wk_r,
                    preferred_element_type=f32)
    vp = jnp.einsum('bld,dhk->blhk', v.astype(cd), wv_r,
                    preferred_element_type=f32)
    s = jnp.einsum('bqhd,bkhd->bhqk', qp.astype(cd), kp.astype(cd),
                   preferred_element_type=f32)
    s = s - s.max(-1, keepdims=True)
    e = jnp.exp(s)
    a = e / e.sum(-1, keepdims=True)
    ctx = jnp.einsum('bhqk,bkhv->bhqv', a.astype(cd), vp.astype(cd),
                     preferred_element_type=f32)
    o = jnp.einsum('bhqv,hvD->bqD', ctx.astype(cd), wfc_r,
                   preferred_element_type=f32) + q
    mu = o.mean(-1, keepdims=True)
    var = ((o - mu) ** 2).mean(-1, keepdims=True)
    y = (o - mu) * jax.lax.rsqrt(var + eps)
    y = y * gamma.reshape(D) + beta.reshape(D)
    return y, a


if __name__ == "__main__":
    B, L, d_model = 2, 8, 32
    n_head, d_k, d_v = 4, 8, 8

    key = jax.random.PRNGKey(0)
    kq, kk, kv, k1, k2, k3, k4 = jax.random.split(key, 7)

    q = jax.random.normal(kq, (B, L, d_model), dtype=jnp.float32)
    k = jax.random.normal(kk, (B, L, d_model), dtype=jnp.float32)
    v = jax.random.normal(kv, (B, L, d_model), dtype=jnp.float32)

    # Linear weights stored as (in, out) = W^T of nn.Linear; LayerNorm default.
    wq = jax.random.normal(k1, (d_model, n_head * d_k), dtype=jnp.float32) * 0.1
    wk = jax.random.normal(k2, (d_model, n_head * d_k), dtype=jnp.float32) * 0.1
    wv = jax.random.normal(k3, (d_model, n_head * d_v), dtype=jnp.float32) * 0.1
    wfc = jax.random.normal(k4, (n_head * d_v, d_model), dtype=jnp.float32) * 0.1
    gamma = jnp.ones((d_model,), dtype=jnp.float32)
    beta = jnp.zeros((d_model,), dtype=jnp.float32)

    out, attn = multi_head_attention(
        q, k, v, wq, wk, wv, wfc, gamma, beta,
        n_head=n_head, d_k=d_k, d_v=d_v)
    jax.block_until_ready((out, attn))

    out_ref, attn_ref = reference(
        q, k, v, wq, wk, wv, wfc, gamma, beta,
        n_head=n_head, d_k=d_k, d_v=d_v)

    assert out.shape == (B, L, d_model)
    assert attn.shape == (B, n_head, L, L)
    assert jnp.allclose(out, out_ref, atol=5e-3, rtol=5e-3), \
        float(jnp.max(jnp.abs(out - out_ref)))
    assert jnp.allclose(attn.astype(jnp.float32), attn_ref,
                        atol=1e-2, rtol=1e-2), \
        float(jnp.max(jnp.abs(attn.astype(jnp.float32) - attn_ref)))
    print("KERNEL_OK")
</pallas_src>

<mosaic_0001>
module attributes {stable_mosaic.version = 11 : i64} {
  func.func @_kv_proj_kernel(%arg0: i32, %arg1: i32, %arg2: memref<1x8x32xbf16, #tpu.memory_space<vmem>>, %arg3: memref<1x8x32xbf16, #tpu.memory_space<vmem>>, %arg4: memref<32x32xbf16, #tpu.memory_space<vmem>>, %arg5: memref<32x32xbf16, #tpu.memory_space<vmem>>, %arg6: memref<1x4x8x8xbf16, #tpu.memory_space<vmem>>, %arg7: memref<1x4x8x8xbf16, #tpu.memory_space<vmem>>) attributes {dimension_semantics = [#tpu.dimension_semantics<parallel>, #tpu.dimension_semantics<parallel>], iteration_bounds = array<i64: 2, 1>, scalar_prefetch = 0 : i64, scratch_operands = 0 : i64, tpu.core_type = #tpu.core_type<tc>, window_params = [{transform_indices = @transform_0, window_bounds = array<i64: 1, 8, 32>}, {transform_indices = @transform_1, window_bounds = array<i64: 1, 8, 32>}, {pipeline_mode = #tpu.pipeline_mode<synchronous>, transform_indices = @transform_2, window_bounds = array<i64: 32, 32>}, {pipeline_mode = #tpu.pipeline_mode<synchronous>, transform_indices = @transform_3, window_bounds = array<i64: 32, 32>}, {transform_indices = @transform_4, window_bounds = array<i64: 1, 4, 8, 8>}, {transform_indices = @transform_5, window_bounds = array<i64: 1, 4, 8, 8>}]} {
    %c0 = arith.constant 0 : index
    %c0_0 = arith.constant 0 : index
    %c0_1 = arith.constant 0 : index
    %0 = vector.load %arg2[%c0, %c0_0, %c0_1] : memref<1x8x32xbf16, #tpu.memory_space<vmem>>, vector<1x8x32xbf16>
    %1 = vector.shape_cast %0 : vector<1x8x32xbf16> to vector<8x32xbf16>
    %c0_2 = arith.constant 0 : index
    %c0_3 = arith.constant 0 : index
    %2 = vector.load %arg4[%c0_2, %c0_3] : memref<32x32xbf16, #tpu.memory_space<vmem>>, vector<32x32xbf16>
    %cst = arith.constant dense<0.000000e+00> : vector<8x32xf32>
    %3 = tpu.matmul %1, %2, %cst {dimension_numbers = #tpu.dot_dimension_numbers<[1], [0], [0], [1], [0, 0, 1, 1], [], []>} : vector<8x32xbf16>, vector<32x32xbf16>, vector<8x32xf32> -> vector<8x32xf32>
    %c0_4 = arith.constant 0 : index
    %c0_5 = arith.constant 0 : index
    %c0_6 = arith.constant 0 : index
    %4 = vector.load %arg3[%c0_4, %c0_5, %c0_6] : memref<1x8x32xbf16, #tpu.memory_space<vmem>>, vector<1x8x32xbf16>
    %5 = vector.shape_cast %4 : vector<1x8x32xbf16> to vector<8x32xbf16>
    %c0_7 = arith.constant 0 : index
    %c0_8 = arith.constant 0 : index
    %6 = vector.load %arg5[%c0_7, %c0_8] : memref<32x32xbf16, #tpu.memory_space<vmem>>, vector<32x32xbf16>
    %cst_9 = arith.constant dense<0.000000e+00> : vector<8x32xf32>
    %7 = tpu.matmul %5, %6, %cst_9 {dimension_numbers = #tpu.dot_dimension_numbers<[1], [0], [0], [1], [0, 0, 1, 1], [], []>} : vector<8x32xbf16>, vector<32x32xbf16>, vector<8x32xf32> -> vector<8x32xf32>
    %8 = vector.extract_strided_slice %3 {offsets = [0, 0], sizes = [8, 8], strides = [1, 1]} : vector<8x32xf32> to vector<8x8xf32>
    %9 = arith.truncf %8 : vector<8x8xf32> to vector<8x8xbf16>
    %c0_10 = arith.constant 0 : index
    %c0_11 = arith.constant 0 : index
    %c0_12 = arith.constant 0 : index
    %c0_13 = arith.constant 0 : index
    %10 = vector.load %arg6[%c0_10, %c0_11, %c0_12, %c0_13] : memref<1x4x8x8xbf16, #tpu.memory_space<vmem>>, vector<1x1x8x8xbf16>
    %11 = vector.shape_cast %10 : vector<1x1x8x8xbf16> to vector<8x8xbf16>
    %12 = vector.shape_cast %9 : vector<8x8xbf16> to vector<1x1x8x8xbf16>
    tpu.vector_store %arg6[%c0_10, %c0_11, %c0_12, %c0_13], %12 {strides = array<i32>} : memref<1x4x8x8xbf16, #tpu.memory_space<vmem>>, vector<1x1x8x8xbf16>,
    %13 = vector.extract_strided_slice %7 {offsets = [0, 0], sizes = [8, 8], strides = [1, 1]} : vector<8x32xf32> to vector<8x8xf32>
    %14 = arith.truncf %13 : vector<8x8xf32> to vector<8x8xbf16>
    %c0_14 = arith.constant 0 : index
    %c0_15 = arith.constant 0 : index
    %c0_16 = arith.constant 0 : index
    %c0_17 = arith.constant 0 : index
    %15 = vector.load %arg7[%c0_14, %c0_15, %c0_16, %c0_17] : memref<1x4x8x8xbf16, #tpu.memory_space<vmem>>, vector<1x1x8x8xbf16>
    %16 = vector.shape_cast %15 : vector<1x1x8x8xbf16> to vector<8x8xbf16>
    %17 = vector.shape_cast %14 : vector<8x8xbf16> to vector<1x1x8x8xbf16>
    tpu.vector_store %arg7[%c0_14, %c0_15, %c0_16, %c0_17], %17 {strides = array<i32>} : memref<1x4x8x8xbf16, #tpu.memory_space<vmem>>, vector<1x1x8x8xbf16>,
    %18 = vector.extract_strided_slice %3 {offsets = [0, 8], sizes = [8, 8], strides = [1, 1]} : vector<8x32xf32> to vector<8x8xf32>
    %19 = arith.truncf %18 : vector<8x8xf32> to vector<8x8xbf16>
    %c0_18 = arith.constant 0 : index
    %c1 = arith.constant 1 : index
    %c0_19 = arith.constant 0 : index
    %c0_20 = arith.constant 0 : index
    %20 = vector.load %arg6[%c0_18, %c1, %c0_19, %c0_20] : memref<1x4x8x8xbf16, #tpu.memory_space<vmem>>, vector<1x1x8x8xbf16>
    %21 = vector.shape_cast %20 : vector<1x1x8x8xbf16> to vector<8x8xbf16>
    %22 = vector.shape_cast %19 : vector<8x8xbf16> to vector<1x1x8x8xbf16>
    tpu.vector_store %arg6[%c0_18, %c1, %c0_19, %c0_20], %22 {strides = array<i32>} : memref<1x4x8x8xbf16, #tpu.memory_space<vmem>>, vector<1x1x8x8xbf16>,
    %23 = vector.extract_strided_slice %7 {offsets = [0, 8], sizes = [8, 8], strides = [1, 1]} : vector<8x32xf32> to vector<8x8xf32>
    %24 = arith.truncf %23 : vector<8x8xf32> to vector<8x8xbf16>
    %c0_21 = arith.constant 0 : index
    %c1_22 = arith.constant 1 : index
    %c0_23 = arith.constant 0 : index
    %c0_24 = arith.constant 0 : index
    %25 = vector.load %arg7[%c0_21, %c1_22, %c0_23, %c0_24] : memref<1x4x8x8xbf16, #tpu.memory_space<vmem>>, vector<1x1x8x8xbf16>
    %26 = vector.shape_cast %25 : vector<1x1x8x8xbf16> to vector<8x8xbf16>
    %27 = vector.shape_cast %24 : vector<8x8xbf16> to vector<1x1x8x8xbf16>
    tpu.vector_store %arg7[%c0_21, %c1_22, %c0_23, %c0_24], %27 {strides = array<i32>} : memref<1x4x8x8xbf16, #tpu.memory_space<vmem>>, vector<1x1x8x8xbf16>,
    %28 = vector.extract_strided_slice %3 {offsets = [0, 16], sizes = [8, 8], strides = [1, 1]} : vector<8x32xf32> to vector<8x8xf32>
    %29 = arith.truncf %28 : vector<8x8xf32> to vector<8x8xbf16>
    %c0_25 = arith.constant 0 : index
    %c2 = arith.constant 2 : index
    %c0_26 = arith.constant 0 : index
    %c0_27 = arith.constant 0 : index
    %30 = vector.load %arg6[%c0_25, %c2, %c0_26, %c0_27] : memref<1x4x8x8xbf16, #tpu.memory_space<vmem>>, vector<1x1x8x8xbf16>
    %31 = vector.shape_cast %30 : vector<1x1x8x8xbf16> to vector<8x8xbf16>
    %32 = vector.shape_cast %29 : vector<8x8xbf16> to vector<1x1x8x8xbf16>
    tpu.vector_store %arg6[%c0_25, %c2, %c0_26, %c0_27], %32 {strides = array<i32>} : memref<1x4x8x8xbf16, #tpu.memory_space<vmem>>, vector<1x1x8x8xbf16>,
    %33 = vector.extract_strided_slice %7 {offsets = [0, 16], sizes = [8, 8], strides = [1, 1]} : vector<8x32xf32> to vector<8x8xf32>
    %34 = arith.truncf %33 : vector<8x8xf32> to vector<8x8xbf16>
    %c0_28 = arith.constant 0 : index
    %c2_29 = arith.constant 2 : index
    %c0_30 = arith.constant 0 : index
    %c0_31 = arith.constant 0 : index
    %35 = vector.load %arg7[%c0_28, %c2_29, %c0_30, %c0_31] : memref<1x4x8x8xbf16, #tpu.memory_space<vmem>>, vector<1x1x8x8xbf16>
    %36 = vector.shape_cast %35 : vector<1x1x8x8xbf16> to vector<8x8xbf16>
    %37 = vector.shape_cast %34 : vector<8x8xbf16> to vector<1x1x8x8xbf16>
    tpu.vector_store %arg7[%c0_28, %c2_29, %c0_30, %c0_31], %37 {strides = array<i32>} : memref<1x4x8x8xbf16, #tpu.memory_space<vmem>>, vector<1x1x8x8xbf16>,
    %38 = vector.extract_strided_slice %3 {offsets = [0, 24], sizes = [8, 8], strides = [1, 1]} : vector<8x32xf32> to vector<8x8xf32>
    %39 = arith.truncf %38 : vector<8x8xf32> to vector<8x8xbf16>
    %c0_32 = arith.constant 0 : index
    %c3 = arith.constant 3 : index
    %c0_33 = arith.constant 0 : index
    %c0_34 = arith.constant 0 : index
    %40 = vector.load %arg6[%c0_32, %c3, %c0_33, %c0_34] : memref<1x4x8x8xbf16, #tpu.memory_space<vmem>>, vector<1x1x8x8xbf16>
    %41 = vector.shape_cast %40 : vector<1x1x8x8xbf16> to vector<8x8xbf16>
    %42 = vector.shape_cast %39 : vector<8x8xbf16> to vector<1x1x8x8xbf16>
    tpu.vector_store %arg6[%c0_32, %c3, %c0_33, %c0_34], %42 {strides = array<i32>} : memref<1x4x8x8xbf16, #tpu.memory_space<vmem>>, vector<1x1x8x8xbf16>,
    %43 = vector.extract_strided_slice %7 {offsets = [0, 24], sizes = [8, 8], strides = [1, 1]} : vector<8x32xf32> to vector<8x8xf32>
    %44 = arith.truncf %43 : vector<8x8xf32> to vector<8x8xbf16>
    %c0_35 = arith.constant 0 : index
    %c3_36 = arith.constant 3 : index
    %c0_37 = arith.constant 0 : index
    %c0_38 = arith.constant 0 : index
    %45 = vector.load %arg7[%c0_35, %c3_36, %c0_37, %c0_38] : memref<1x4x8x8xbf16, #tpu.memory_space<vmem>>, vector<1x1x8x8xbf16>
    %46 = vector.shape_cast %45 : vector<1x1x8x8xbf16> to vector<8x8xbf16>
    %47 = vector.shape_cast %44 : vector<8x8xbf16> to vector<1x1x8x8xbf16>
    tpu.vector_store %arg7[%c0_35, %c3_36, %c0_37, %c0_38], %47 {strides = array<i32>} : memref<1x4x8x8xbf16, #tpu.memory_space<vmem>>, vector<1x1x8x8xbf16>,
    return
  }
  func.func @transform_0(%arg0: i32, %arg1: i32) -> (i32, i32, i32) {
    %c0_i32 = arith.constant 0 : i32
    %c0_i32_0 = arith.constant 0 : i32
    return %arg0, %arg1, %c0_i32 : i32, i32, i32
  }
  func.func @transform_1(%arg0: i32, %arg1: i32) -> (i32, i32, i32) {
    %c0_i32 = arith.constant 0 : i32
    %c0_i32_0 = arith.constant 0 : i32
    return %arg0, %arg1, %c0_i32 : i32, i32, i32
  }
  func.func @transform_2(%arg0: i32, %arg1: i32) -> (i32, i32) {
    %c0_i32 = arith.constant 0 : i32
    %c0_i32_0 = arith.constant 0 : i32
    %c0_i32_1 = arith.constant 0 : i32
    return %c0_i32, %c0_i32_0 : i32, i32
  }
  func.func @transform_3(%arg0: i32, %arg1: i32) -> (i32, i32) {
    %c0_i32 = arith.constant 0 : i32
    %c0_i32_0 = arith.constant 0 : i32
    %c0_i32_1 = arith.constant 0 : i32
    return %c0_i32, %c0_i32_0 : i32, i32
  }
  func.func @transform_4(%arg0: i32, %arg1: i32) -> (i32, i32, i32, i32) {
    %c0_i32 = arith.constant 0 : i32
    %c0_i32_0 = arith.constant 0 : i32
    %c0_i32_1 = arith.constant 0 : i32
    return %arg0, %c0_i32, %arg1, %c0_i32_0 : i32, i32, i32, i32
  }
  func.func @transform_5(%arg0: i32, %arg1: i32) -> (i32, i32, i32, i32) {
    %c0_i32 = arith.constant 0 : i32
    %c0_i32_0 = arith.constant 0 : i32
    %c0_i32_1 = arith.constant 0 : i32
    return %arg0, %c0_i32, %arg1, %c0_i32_0 : i32, i32, i32, i32
  }
}

</mosaic_0001>

<llo_original>
// kernel: tpu_custom_call.1
$region0: #{tpu_custom_call.1}
  #allocation0 [shape = 'u32[]', space=smem, size = 0x4, offset = 0x4, fixed_abs, tag = 'smem constant byte address 0x4 - core index']
  #allocation1 [shape = 'u32[72,128]{1,0:T(1,128)}', space=vmem, size = 0x9000, scoped, tag = 'internal scratch']
  %s0 = inlined_call_operand.hbm [shape: bf16[2,8,32], index: 0, kind: input, shape index: {}]
  %s1 = inlined_call_operand.hbm [shape: bf16[2,8,32], index: 1, kind: input, shape index: {}]
  %s2 = inlined_call_operand.hbm [shape: bf16[32,32], index: 2, kind: input, shape index: {}]
  %s3 = inlined_call_operand.hbm [shape: bf16[32,32], index: 3, kind: input, shape index: {}]
  %s4 = inlined_call_operand.hbm [shape: bf16[2,4,8,8], index: 4, kind: output, shape index: {0}]
  %s5 = inlined_call_operand.hbm [shape: bf16[2,4,8,8], index: 5, kind: output, shape index: {1}]
  %6 = xla_tuple %s4, %s5
  %s7 = sld [smem:[#allocation0]]
  $region73: #{tpu_custom_call.1} parent=0
    _
  %s9 = ssub.s32 1, %s7
  %s10 = scalar_select 0, %s9, %s7
  $region1: #{tpu_custom_call.1} parent=0
    #allocation2 [shape = 'u8[4096]{0}', space=vmem, size = 0x1000, scoped, tag = 'input window, operand 0']
    #allocation3 [shape = 's32[2]{0}', space=sflag, size = 0x8, scoped, tag = 'scoped memory for tpu_custom_call.1']
    #allocation4 [shape = 's32[2]{0}', space=sflag, size = 0x8, scoped, tag = 'scoped memory for tpu_custom_call.1']
    #allocation5 [shape = 'u8[4096]{0}', space=vmem, size = 0x1000, scoped, tag = 'input window, operand 1']
    #allocation6 [shape = 's32[2]{0}', space=sflag, size = 0x8, scoped, tag = 'scoped memory for tpu_custom_call.1']
    #allocation7 [shape = 'u8[8192]{0}', space=vmem, size = 0x2000, scoped, tag = 'input window, operand 2, single buffered']
    #allocation8 [shape = 'u8[8192]{0}', space=vmem, size = 0x2000, scoped, tag = 'input window, operand 3, single buffered']
    #allocation9 [shape = 's32[1]{0}', space=sflag, size = 0x4, scoped, tag = 'scoped memory for tpu_custom_call.1']
    #allocation10 [shape = 'u8[16384]{0}', space=vmem, size = 0x4000, scoped, tag = 'output window, operand 0']
    #allocation11 [shape = 'u8[16384]{0}', space=vmem, size = 0x4000, scoped, tag = 'output window, operand 1']
    #allocation12 [shape = 's32[2]{0}', space=sflag, size = 0x8, scoped, tag = 'scoped memory for tpu_custom_call.1']
    %11 = vsyncpa [#allocation3], 0
    %s12 = scalar_lea.sflag [#allocation3], 1
    %13 = vsyncpa %s12, 0
    %14 = vsyncpa [#allocation6], 0
    %s15 = scalar_lea.sflag [#allocation6], 1
    %16 = vsyncpa %s15, 0
    %17 = vsyncpa [#allocation9], 0
    %18 = vsyncpa [#allocation4], 0
    %s19 = scalar_lea.sflag [#allocation4], 1
    %20 = vsyncpa %s19, 0
    %21 = vsyncpa [#allocation12], 0
    %s22 = scalar_lea.sflag [#allocation12], 1
    %23 = vsyncpa %s22, 0
    loop: start=0, step=1, limit=4
    $region2: #{tpu_custom_call.1} parent=1 // loop_pre_header
      _
    $region3: #{tpu_custom_call.1} parent=1 // loop_header
      %s25 = sphi 0, %s29
      %p26 = scmp.ge.s32.totalorder %s25, 4
      %s32 = sphi 0, %s44
      %s33 = sphi 0, %s40
      %s34 = sphi 0, %s32
      %s35 = sphi 0, %s33
      %s36 = sphi 0, %s34
      %s37 = sphi 0, %s35
      %s49 = sphi 0, %s51
      %s52 = sphi 0, %s49
      %s53 = sphi 0, %s52
      %s69 = sphi 0, %s53
      %s77 = sphi 0, %s79
      %s80 = sphi 0, %s77
      %s81 = sphi 0, %s80
      %s97 = sphi 0, %s81
      %s101 = sphi 0, %s101
      %s103 = sphi 0, %s101
      %s104 = sphi 0, %s103
      %s118 = sphi 0, %s104
      %s122 = sphi 0, %s122
      %s124 = sphi 0, %s122
      %s125 = sphi 0, %s124
      %s139 = sphi 0, %s125
      %s147 = sphi 0, %s149
      %s150 = sphi 0, %s147
      %s151 = sphi 0, %s150
      %s167 = sphi 0, %s151
      %s175 = sphi 0, %s177
      %s178 = sphi 0, %s175
      %s179 = sphi 0, %s178
      %s195 = sphi 0, %s179
    $region4: #{tpu_custom_call.1} parent=1 // loop_header_branch
      %28 = sbr.rel (%p26) target = $region8
    $region5: #{tpu_custom_call.1} parent=1 // loop_body
      %s30 = ssub.s32 %s25, 1
      %s31 = ssub.s32 %s25, 2
      %s38 = sadd.s32 1, %s33
      %p39 = scmp.ge.s32.totalorder %s38, 1
      %s40 = scalar_select %p39, 0, %s38
      %s41 = sadd.s32 1, %s32
      %s42 = scalar_select %p39, %s41, %s32
      %p43 = scmp.ge.s32.totalorder %s42, 2
      %s44 = scalar_select %p43, 0, %s42
      %s45 = ssub.s32 %s32, %s44
      %s46 = ssub.s32 %s33, %s40
      %s47 = sor.u32 %s45, %s46
      %p48 = scmp.eq.s32.totalorder %s47, 0
      %s50 = sadd.s32 %s49, 1
      %s51 = scalar_select %p48, %s49, %s50
      %p54 = pneg %p48
      %p55 = scmp.eq.s32.totalorder %s25, 1
      %p56 = por %p54, %p55
      %p57 = scmp.ne.s32.totalorder %s49, %s52
      %p58 = scmp.eq.s32.totalorder %s25, 0
      %p59 = por %p57, %p58
      %p60 = scmp.ne.s32.totalorder %s49, %s52
      %p61 = scmp.eq.s32.totalorder %s30, 1
      %p62 = por %p60, %p61
      %p63 = scmp.ne.s32.totalorder %s52, %s53
      %p64 = scmp.eq.s32.totalorder %s30, 0
      %p65 = por %p63, %p64
      %p66 = scmp.ne.s32.totalorder %s52, %s53
      %p67 = scmp.eq.s32.totalorder %s31, 1
      %p68 = por %p66, %p67
      %p70 = scmp.ne.s32.totalorder %s53, %s69
      %p71 = scmp.eq.s32.totalorder %s31, 0
      %p72 = por %p70, %p71
      %s73 = ssub.s32 %s32, %s44
      %s74 = ssub.s32 %s33, %s40
      %s75 = sor.u32 %s73, %s74
      %p76 = scmp.eq.s32.totalorder %s75, 0
      %s78 = sadd.s32 %s77, 1
      %s79 = scalar_select %p76, %s77, %s78
      %p82 = pneg %p76
      %p83 = scmp.eq.s32.totalorder %s25, 1
      %p84 = por %p82, %p83
      %p85 = scmp.ne.s32.totalorder %s77, %s80
      %p86 = scmp.eq.s32.totalorder %s25, 0
      %p87 = por %p85, %p86
      %p88 = scmp.ne.s32.totalorder %s77, %s80
      %p89 = scmp.eq.s32.totalorder %s30, 1
      %p90 = por %p88, %p89
      %p91 = scmp.ne.s32.totalorder %s80, %s81
      %p92 = scmp.eq.s32.totalorder %s30, 0
      %p93 = por %p91, %p92
      %p94 = scmp.ne.s32.totalorder %s80, %s81
      %p95 = scmp.eq.s32.totalorder %s31, 1
      %p96 = por %p94, %p95
      %p98 = scmp.ne.s32.totalorder %s81, %s97
      %p99 = scmp.eq.s32.totalorder %s31, 0
      %p100 = por %p98, %p99
      %s102 = sadd.s32 %s101, 1
      %p105 = scmp.eq.s32.totalorder %s25, 1
      %p106 = scmp.ne.s32.totalorder %s101, %s103
      %p107 = scmp.eq.s32.totalorder %s25, 0
      %p108 = por %p106, %p107
      %p109 = scmp.ne.s32.totalorder %s101, %s103
      %p110 = scmp.eq.s32.totalorder %s30, 1
      %p111 = por %p109, %p110
      %p112 = scmp.ne.s32.totalorder %s103, %s104
      %p113 = scmp.eq.s32.totalorder %s30, 0
      %p114 = por %p112, %p113
      %p115 = scmp.ne.s32.totalorder %s103, %s104
      %p116 = scmp.eq.s32.totalorder %s31, 1
      %p117 = por %p115, %p116
      %p119 = scmp.ne.s32.totalorder %s104, %s118
      %p120 = scmp.eq.s32.totalorder %s31, 0
      %p121 = por %p119, %p120
      %s123 = sadd.s32 %s122, 1
      %p126 = scmp.eq.s32.totalorder %s25, 1
      %p127 = scmp.ne.s32.totalorder %s122, %s124
      %p128 = scmp.eq.s32.totalorder %s25, 0
      %p129 = por %p127, %p128
      %p130 = scmp.ne.s32.totalorder %s122, %s124
      %p131 = scmp.eq.s32.totalorder %s30, 1
      %p132 = por %p130, %p131
      %p133 = scmp.ne.s32.totalorder %s124, %s125
      %p134 = scmp.eq.s32.totalorder %s30, 0
      %p135 = por %p133, %p134
      %p136 = scmp.ne.s32.totalorder %s124, %s125
      %p137 = scmp.eq.s32.totalorder %s31, 1
      %p138 = por %p136, %p137
      %p140 = scmp.ne.s32.totalorder %s125, %s139
      %p141 = scmp.eq.s32.totalorder %s31, 0
      %p142 = por %p140, %p141
      %s143 = ssub.s32 %s32, %s44
      %s144 = ssub.s32 %s33, %s40
      %s145 = sor.u32 %s143, %s144
      %p146 = scmp.eq.s32.totalorder %s145, 0
      %s148 = sadd.s32 %s147, 1
      %s149 = scalar_select %p146, %s147, %s148
      %p152 = pneg %p146
      %p153 = scmp.eq.s32.totalorder %s25, 1
      %p154 = por %p152, %p153
      %p155 = scmp.ne.s32.totalorder %s147, %s150
      %p156 = scmp.eq.s32.totalorder %s25, 0
      %p157 = por %p155, %p156
      %p158 = scmp.ne.s32.totalorder %s147, %s150
      %p159 = scmp.eq.s32.totalorder %s30, 1
      %p160 = por %p158, %p159
      %p161 = scmp.ne.s32.totalorder %s150, %s151
      %p162 = scmp.eq.s32.totalorder %s30, 0
      %p163 = por %p161, %p162
      %p164 = scmp.ne.s32.totalorder %s150, %s151
      %p165 = scmp.eq.s32.totalorder %s31, 1
      %p166 = por %p164, %p165
      %p168 = scmp.ne.s32.totalorder %s151, %s167
      %p169 = scmp.eq.s32.totalorder %s31, 0
      %p170 = por %p168, %p169
      %s171 = ssub.s32 %s32, %s44
      %s172 = ssub.s32 %s33, %s40
      %s173 = sor.u32 %s171, %s172
      %p174 = scmp.eq.s32.totalorder %s173, 0
      %s176 = sadd.s32 %s175, 1
      %s177 = scalar_select %p174, %s175, %s176
      %p180 = pneg %p174
      %p181 = scmp.eq.s32.totalorder %s25, 1
      %p182 = por %p180, %p181
      %p183 = scmp.ne.s32.totalorder %s175, %s178
      %p184 = scmp.eq.s32.totalorder %s25, 0
      %p185 = por %p183, %p184
      %p186 = scmp.ne.s32.totalorder %s175, %s178
      %p187 = scmp.eq.s32.totalorder %s30, 1
      %p188 = por %p186, %p187
      %p189 = scmp.ne.s32.totalorder %s178, %s179
      %p190 = scmp.eq.s32.totalorder %s30, 0
      %p191 = por %p189, %p190
      %p192 = scmp.ne.s32.totalorder %s178, %s179
      %p193 = scmp.eq.s32.totalorder %s31, 1
      %p194 = por %p192, %p193
      %p196 = scmp.ne.s32.totalorder %s179, %s195
      %p197 = scmp.eq.s32.totalorder %s31, 0
      %p198 = por %p196, %p197
      %p199 = scmp.le.s32.totalorder 1, %s25
      %p200 = scmp.lt.s32.totalorder %s25, 3
      %p201 = pnand %p199, %p200
      %p202 = pneg %p201
      // Predicated region
      $region9: #{tpu_custom_call.1} parent=5 // pred_check
        _
      $region10: #{tpu_custom_call.1} parent=5 // pred_check_branch
        %204 = sbr.rel (%p201) target = $region12
      $region11: #{tpu_custom_call.1} parent=5 // pred_region
        %s205 = ssub.s32 %s25, 1
        // Predicated region
        $region13: #{tpu_custom_call.1} parent=11 // pred_check
          %p206 = pneg %p114
        $region14: #{tpu_custom_call.1} parent=11 // pred_check_branch
          %208 = sbr.rel (%p206) target = $region16
        $region15: #{tpu_custom_call.1} parent=11 // pred_region
          %210 = vsyncadd [#allocation6], 0
          %s211 = sshll.u32 %s2, 4
          %s212 = int_to_ptr.hbm [resolvable:$true] %s211
          %s213 = sshll.u32 [#allocation7], 4
          %s214 = int_to_ptr.vmem [resolvable:$true] %s213
          %219 = dma.hbm_to_vmem [thread:$0]  %s212, 256, %s214, [#allocation6], 64, 64, 4
        $region16: #{tpu_custom_call.1} parent=11 // pred_fallthru
          _
        // Predicated region
        $region17: #{tpu_custom_call.1} parent=11 // pred_check
          %p220 = pneg %p135
        $region18: #{tpu_custom_call.1} parent=11 // pred_check_branch
          %222 = sbr.rel (%p220) target = $region20
        $region19: #{tpu_custom_call.1} parent=11 // pred_region
          %224 = vsyncadd [#allocation9], 0
          %s225 = sshll.u32 %s3, 4
          %s226 = int_to_ptr.hbm [resolvable:$true] %s225
          %s227 = sshll.u32 [#allocation8], 4
          %s228 = int_to_ptr.vmem [resolvable:$true] %s227
          %233 = dma.hbm_to_vmem [thread:$0]  %s226, 256, %s228, [#allocation9], 64, 64, 4
        $region20: #{tpu_custom_call.1} parent=11 // pred_fallthru
          _
      $region12: #{tpu_custom_call.1} parent=5 // pred_fallthru
        _
      %p234 = scmp.lt.s32.totalorder %s25, 2
      // Predicated region
      $region21: #{tpu_custom_call.1} parent=5 // pred_check
        %p235 = pneg %p234
      $region22: #{tpu_custom_call.1} parent=5 // pred_check_branch
        %237 = sbr.rel (%p235) target = $region24
      $region23: #{tpu_custom_call.1} parent=5 // pred_region
        // Predicated region
        $region25: #{tpu_custom_call.1} parent=23 // pred_check
          %p238 = pneg %p59
        $region26: #{tpu_custom_call.1} parent=23 // pred_check_branch
          %240 = sbr.rel (%p238) target = $region28
        $region27: #{tpu_custom_call.1} parent=23 // pred_region
          %s241 = sand.u32 %s49, 1
          %s242 = scalar_lea.sflag [#allocation3], %s241
          %s243 = sand.u32 %s49, 1
          %s244 = smul.addr %s243, 4
          %s245 = scalar_lea.vmem [#allocation2], %s244
          %247 = vsyncadd %s242, 0
          %s248 = sadd.s32 %s33, %s32
          %s249 = smul.addr %s248, 4
          %s250 = scalar_lea.hbm %s0, %s249
          %s252 = sshll.u32 %s250, 4
          %s253 = int_to_ptr.hbm [resolvable:$true] %s252
          %s254 = sshll.u32 %s245, 4
          %s255 = int_to_ptr.vmem [resolvable:$true] %s254
          %257 = dma.hbm_to_vmem [thread:$0]  %s253, 64, %s255, %s242
        $region28: #{tpu_custom_call.1} parent=23 // pred_fallthru
          _
        // Predicated region
        $region29: #{tpu_custom_call.1} parent=23 // pred_check
          %p258 = pneg %p87
        $region30: #{tpu_custom_call.1} parent=23 // pred_check_branch
          %260 = sbr.rel (%p258) target = $region32
        $region31: #{tpu_custom_call.1} parent=23 // pred_region
          %s261 = sand.u32 %s25, 1
          %s262 = scalar_lea.sflag [#allocation6], %s261
          %s263 = sand.u32 %s77, 1
          %s264 = smul.addr %s263, 4
          %s265 = scalar_lea.vmem [#allocation5], %s264
          %267 = vsyncadd %s262, 0
          %s268 = sadd.s32 %s33, %s32
          %s269 = smul.addr %s268, 4
          %s270 = scalar_lea.hbm %s1, %s269
          %s272 = sshll.u32 %s270, 4
          %s273 = int_to_ptr.hbm [resolvable:$true] %s272
          %s274 = sshll.u32 %s265, 4
          %s275 = int_to_ptr.vmem [resolvable:$true] %s274
          %277 = dma.hbm_to_vmem [thread:$0]  %s273, 64, %s275, %s262
        $region32: #{tpu_custom_call.1} parent=23 // pred_fallthru
          _
      $region24: #{tpu_custom_call.1} parent=5 // pred_fallthru
        _
      %p278 = scmp.le.s32.totalorder 1, %s25
      %p279 = scmp.lt.s32.totalorder %s25, 3
      %p280 = pnand %p278, %p279
      %p281 = pneg %p280
      // Predicated region
      $region33: #{tpu_custom_call.1} parent=5 // pred_check
        _
      $region34: #{tpu_custom_call.1} parent=5 // pred_check_branch
        %283 = sbr.rel (%p280) target = $region36
      $region35: #{tpu_custom_call.1} parent=5 // pred_region
        %s284 = ssub.s32 %s25, 1
        %s285 = sand.u32 %s52, 1
        %s286 = scalar_lea.sflag [#allocation3], %s285
        %s287 = sand.u32 %s52, 1
        %s288 = smul.addr %s287, 4
        %s289 = scalar_lea.vmem [#allocation2], %s288
        // Predicated region
        $region37: #{tpu_custom_call.1} parent=35 // pred_check
          %p290 = pneg %p65
        $region38: #{tpu_custom_call.1} parent=35 // pred_check_branch
          %292 = sbr.rel (%p290) target = $region40
        $region39: #{tpu_custom_call.1} parent=35 // pred_region
          %294 = dma.done %s286, 64
        $region40: #{tpu_custom_call.1} parent=35 // pred_fallthru
          _
        %s295 = sand.u32 %s30, 1
        %s296 = scalar_lea.sflag [#allocation6], %s295
        %s297 = sand.u32 %s80, 1
        %s298 = smul.addr %s297, 4
        %s299 = scalar_lea.vmem [#allocation5], %s298
        // Predicated region
        $region41: #{tpu_custom_call.1} parent=35 // pred_check
          %p300 = pneg %p93
        $region42: #{tpu_custom_call.1} parent=35 // pred_check_branch
          %302 = sbr.rel (%p300) target = $region44
        $region43: #{tpu_custom_call.1} parent=35 // pred_region
          %304 = dma.done %s296, 64
        $region44: #{tpu_custom_call.1} parent=35 // pred_fallthru
          _
        // Predicated region
        $region45: #{tpu_custom_call.1} parent=35 // pred_check
          %p305 = pneg %p114
        $region46: #{tpu_custom_call.1} parent=35 // pred_check_branch
          %307 = sbr.rel (%p305) target = $region48
        $region47: #{tpu_custom_call.1} parent=35 // pred_region
          %309 = dma.done [#allocation6], 256
        $region48: #{tpu_custom_call.1} parent=35 // pred_fallthru
          _
        // Predicated region
        $region49: #{tpu_custom_call.1} parent=35 // pred_check
          %p310 = pneg %p135
        $region50: #{tpu_custom_call.1} parent=35 // pred_check_branch
          %312 = sbr.rel (%p310) target = $region52
        $region51: #{tpu_custom_call.1} parent=35 // pred_region
          %314 = dma.done [#allocation9], 256
        $region52: #{tpu_custom_call.1} parent=35 // pred_fallthru
          _
        %s315 = sand.u32 %s52, 1
        %s316 = scalar_lea.sflag [#allocation3], %s315
        %s317 = sand.u32 %s52, 1
        %s318 = smul.addr %s317, 4
        %s319 = scalar_lea.vmem [#allocation2], %s318
        %p320 = pneg %p65
        %p321 = pneg %p62
        %s322 = sand.u32 %s30, 1
        %s323 = scalar_lea.sflag [#allocation6], %s322
        %s324 = sand.u32 %s80, 1
        %s325 = smul.addr %s324, 4
        %s326 = scalar_lea.vmem [#allocation5], %s325
        %p327 = pneg %p93
        %p328 = pneg %p90
        %p329 = pneg %p114
        %p330 = pneg %p111
        %p331 = pneg %p135
        %p332 = pneg %p132
        %p333 = pneg %p163
        %p334 = pneg %p160
        %s335 = sand.u32 %s150, 1
        %s336 = scalar_lea.sflag [#allocation4], %s335
        %s337 = sand.u32 %s150, 1
        %s338 = smul.addr %s337, 16
        %s339 = scalar_lea.vmem [#allocation10], %s338
        %p340 = pneg %p191
        %p341 = pneg %p188
        %s342 = sand.u32 %s178, 1
        %s343 = scalar_lea.sflag [#allocation12], %s342
        %s344 = sand.u32 %s178, 1
        %s345 = smul.addr %s344, 16
        %s346 = scalar_lea.vmem [#allocation11], %s345
        %v348 = vld [vmem:[%s289] sm:$0xf]
        %v349 = vld [vmem:[#allocation7] sm:$0xf]
        %v350 = vld [vmem:[#allocation7 + $0x4] sm:$0xf]
        %v351 = vld [vmem:[#allocation7 + $0x8] sm:$0xf]
        %v352 = vld [vmem:[#allocation7 + $0xc] sm:$0xf]
        %v357 = vunpack.c.l.b16 %v349
        %v358 = vunpack.c.l.b16 %v350
        %v359 = vunpack.c.l.b16 %v351
        %v360 = vunpack.c.l.b16 %v352
        %v361 = vpack.c.b16 %v358, %v357
        %v362 = vpack.c.b16 %v360, %v359
        %vm365 = vcmask 261120
        %v367 = vsel %vm365, %v348, 0
        %369 = vmatpush.bf16.msra.mxu0 0
        %370 = vmatpush.bf16.msra.mxu0 0
        %371 = vmatpush.bf16.msra.mxu0 0
        %372 = vmatpush.bf16.msra.mxu0 0
        %373 = vmatpush.bf16.msra.mxu0 0
        %374 = vmatpush.bf16.msra.mxu0 0
        %375 = vmatpush.bf16.msra.mxu0 %v362
        %376 = vmatpush.bf16.msra.mxu0 %v361
        %377 = vmatmul.bf16.gmra.mxu0 %v367
        %v378 = vpop.f32.mrf.mxu0
        %v379 = vadd.f32 0.0, %v378
        %v380 = vpop.f32.mrf.mxu0
        %381 = vdwg.mxu0
        %v382 = vld [vmem:[%s299] sm:$0xf]
        %v383 = vld [vmem:[#allocation8] sm:$0xf]
        %v384 = vld [vmem:[#allocation8 + $0x4] sm:$0xf]
        %v385 = vld [vmem:[#allocation8 + $0x8] sm:$0xf]
        %v386 = vld [vmem:[#allocation8 + $0xc] sm:$0xf]
        %v391 = vunpack.c.l.b16 %v383
        %v392 = vunpack.c.l.b16 %v384
        %v393 = vunpack.c.l.b16 %v385
        %v394 = vunpack.c.l.b16 %v386
        %v395 = vpack.c.b16 %v392, %v391
        %v396 = vpack.c.b16 %v394, %v393
        %v400 = vsel %vm365, %v382, 0
        %402 = vmatpush.bf16.msra.mxu0 0
        %403 = vmatpush.bf16.msra.mxu0 0
        %404 = vmatpush.bf16.msra.mxu0 0
        %405 = vmatpush.bf16.msra.mxu0 0
        %406 = vmatpush.bf16.msra.mxu0 0
        %407 = vmatpush.bf16.msra.mxu0 0
        %408 = vmatpush.bf16.msra.mxu0 %v396
        %409 = vmatpush.bf16.msra.mxu0 %v395
        %410 = vmatmul.bf16.gmra.mxu0 %v400
        %v411 = vpop.f32.mrf.mxu0
        %v412 = vadd.f32 0.0, %v411
        %v413 = vpop.f32.mrf.mxu0
        %414 = vdwg.mxu0
        %v415 = vpack.c.bf16 %v379, %v379
        %vm416 = vcmask 60416
        %417 = vst.msk [vmem:[%s339] sm:$0xf] %vm416, %v415
        %v418 = vpack.c.bf16 %v412, %v412
        %419 = vst.msk [vmem:[%s346] sm:$0xf] %vm416, %v418
        %421 = vrot.lane.b32.xlu0 %v415, 120
        %v422 = vpop.permute.xlu0 %421
        %s424 = scalar_lea.vmem %s339, 4 [#allocation10]
        %425 = vst.msk [vmem:[%s424] sm:$0xf] %vm416, %v422
        %427 = vrot.lane.b32.xlu0 %v418, 120
        %v428 = vpop.permute.xlu0 %427
        %s430 = scalar_lea.vmem %s346, 4 [#allocation11]
        %431 = vst.msk [vmem:[%s430] sm:$0xf] %vm416, %v428
        %432 = vrot.lane.b32.xlu0 %v415, 112
        %v433 = vpop.permute.xlu0 %432
        %s435 = scalar_lea.vmem %s339, 8 [#allocation10]
        %436 = vst.msk [vmem:[%s435] sm:$0xf] %vm416, %v433
        %437 = vrot.lane.b32.xlu0 %v418, 112
        %v438 = vpop.permute.xlu0 %437
        %s440 = scalar_lea.vmem %s346, 8 [#allocation11]
        %441 = vst.msk [vmem:[%s440] sm:$0xf] %vm416, %v438
        %442 = vrot.lane.b32.xlu0 %v415, 104
        %v443 = vpop.permute.xlu0 %442
        %s445 = scalar_lea.vmem %s339, 12 [#allocation10]
        %446 = vst.msk [vmem:[%s445] sm:$0xf] %vm416, %v443
        %447 = vrot.lane.b32.xlu0 %v418, 104
        %v448 = vpop.permute.xlu0 %447
        %s450 = scalar_lea.vmem %s346, 12 [#allocation11]
        %451 = vst.msk [vmem:[%s450] sm:$0xf] %vm416, %v448
        %s452 = sand.u32 %s150, 1
        %s453 = scalar_lea.sflag [#allocation4], %s452
        %s454 = sand.u32 %s150, 1
        %s455 = smul.addr %s454, 16
        %s456 = scalar_lea.vmem [#allocation10], %s455
        %s457 = sand.u32 %s178, 1
        %s458 = scalar_lea.sflag [#allocation12], %s457
        %s459 = sand.u32 %s178, 1
        %s460 = smul.addr %s459, 16
        %s461 = scalar_lea.vmem [#allocation11], %s460
        // Predicated region
        $region53: #{tpu_custom_call.1} parent=35 // pred_check
          %p462 = pneg %p160
        $region54: #{tpu_custom_call.1} parent=35 // pred_check_branch
          %464 = sbr.rel (%p462) target = $region56
        $region55: #{tpu_custom_call.1} parent=35 // pred_region
          %466 = vsyncadd %s453, 0
          %s467 = smul.addr %s34, 4
          %s468 = sadd.s32 %s35, %s467
          %s469 = smul.addr %s468, 4
          %s470 = scalar_lea.hbm %s4, %s469
          %s471 = sshll.u32 %s456, 4
          %s472 = int_to_ptr.vmem [resolvable:$true] %s471
          %s473 = sshll.u32 %s470, 4
          %s474 = int_to_ptr.hbm [resolvable:$true] %s473
          %479 = dma.vmem_to_hbm [thread:$0]  %s472, 256, %s474, %s453, 64, 64, 4
        $region56: #{tpu_custom_call.1} parent=35 // pred_fallthru
          _
        // Predicated region
        $region57: #{tpu_custom_call.1} parent=35 // pred_check
          %p480 = pneg %p188
        $region58: #{tpu_custom_call.1} parent=35 // pred_check_branch
          %482 = sbr.rel (%p480) target = $region60
        $region59: #{tpu_custom_call.1} parent=35 // pred_region
          %484 = vsyncadd %s458, 0
          %s485 = smul.addr %s34, 4
          %s486 = sadd.s32 %s35, %s485
          %s487 = smul.addr %s486, 4
          %s488 = scalar_lea.hbm %s5, %s487
          %s489 = sshll.u32 %s461, 4
          %s490 = int_to_ptr.vmem [resolvable:$true] %s489
          %s491 = sshll.u32 %s488, 4
          %s492 = int_to_ptr.hbm [resolvable:$true] %s491
          %497 = dma.vmem_to_hbm [thread:$0]  %s490, 256, %s492, %s458, 64, 64, 4
        $region60: #{tpu_custom_call.1} parent=35 // pred_fallthru
          _
      $region36: #{tpu_custom_call.1} parent=5 // pred_fallthru
        _
      %p498 = scmp.le.s32.totalorder 2, %s25
      // Predicated region
      $region61: #{tpu_custom_call.1} parent=5 // pred_check
        %p499 = pneg %p498
      $region62: #{tpu_custom_call.1} parent=5 // pred_check_branch
        %501 = sbr.rel (%p499) target = $region64
      $region63: #{tpu_custom_call.1} parent=5 // pred_region
        %s502 = ssub.s32 %s25, 2
        // Predicated region
        $region65: #{tpu_custom_call.1} parent=63 // pred_check
          %p503 = pneg %p166
        $region66: #{tpu_custom_call.1} parent=63 // pred_check_branch
          %505 = sbr.rel (%p503) target = $region68
        $region67: #{tpu_custom_call.1} parent=63 // pred_region
          %s506 = sand.u32 %s151, 1
          %s507 = scalar_lea.sflag [#allocation4], %s506
          %s508 = sand.u32 %s151, 1
          %s509 = smul.addr %s508, 16
          %s510 = scalar_lea.vmem [#allocation10], %s509
          %512 = dma.done %s507, 256
        $region68: #{tpu_custom_call.1} parent=63 // pred_fallthru
          _
        // Predicated region
        $region69: #{tpu_custom_call.1} parent=63 // pred_check
          %p513 = pneg %p194
        $region70: #{tpu_custom_call.1} parent=63 // pred_check_branch
          %515 = sbr.rel (%p513) target = $region72
        $region71: #{tpu_custom_call.1} parent=63 // pred_region
          %s516 = sand.u32 %s179, 1
          %s517 = scalar_lea.sflag [#allocation12], %s516
          %s518 = sand.u32 %s179, 1
          %s519 = smul.addr %s518, 16
          %s520 = scalar_lea.vmem [#allocation11], %s519
          %522 = dma.done %s517, 256
        $region72: #{tpu_custom_call.1} parent=63 // pred_fallthru
          _
      $region64: #{tpu_custom_call.1} parent=5 // pred_fallthru
        _
    $region6: #{tpu_custom_call.1} parent=1 // loop_footer
      %s29 = sadd.s32 1, %s25
    $region7: #{tpu_custom_call.1} parent=1 // loop_footer_branch
      %24 = sbr.rel target = $region3
    $region8: #{tpu_custom_call.1} parent=1 // loop_exit
      _
    %523 = vsyncpa [#allocation3], 1
    %s524 = scalar_lea.sflag [#allocation3], 1
    %525 = vsyncpa %s524, 1
    %526 = vsyncpa [#allocation6], 1
    %s527 = scalar_lea.sflag [#allocation6], 1
    %528 = vsyncpa %s527, 1
    %529 = vsyncpa [#allocation9], 1
    %530 = vsyncpa [#allocation4], 1
    %s531 = scalar_lea.sflag [#allocation4], 1
    %532 = vsyncpa %s531, 1
    %533 = vsyncpa [#allocation12], 1
    %s534 = scalar_lea.sflag [#allocation12], 1
    %535 = vsyncpa %s534, 1

</llo_original>
